<compile_context>
chip_gen: v7x
topology: tpu7x:2x2x1
jax: 0.10.0
libtpu: 0.0.40
codegen_flags: <defaults>
</compile_context>

<pallas_src>
from collections import defaultdict

import jax
import jax.numpy as jnp
from jax.experimental import pallas as pl
from jax.experimental.pallas import tpu as pltpu

K_SIZE = 3
DENSE_C_MAX = 512            # keep the dense (C,C) operator only while it is tiny
MIN_BLOCK_BYTES = 512 * 1024
MIN_GRID_STEPS = 8           # >= 4 steps per TensorCore on v7x's 2-core chips
LANE = 128


# ---------------------------------------------------------------------------
# host-side helpers
# ---------------------------------------------------------------------------
def _vmem_limits():
    """Returns (physical VMEM bytes, scoped VMEM limit we request)."""
    try:
        cap = int(pltpu.get_tpu_info().vmem_capacity_bytes)
    except Exception:                      # query unavailable -> be conservative
        cap = 64 << 20                     # v7x per-TensorCore VMEM
    # Keep buffers + compiler temporaries well under physical capacity; also
    # never rely on the 16/32 MiB default scoped limit on v5e/v6e.
    return cap, int(min(cap // 2, 48 << 20))


def _build_taps(w, dilations):
    """channel-offset -> folded coefficient (x2: both pool branches use max_y)."""
    tap_idx = defaultdict(list)
    for j, d in enumerate(dilations):
        for t in range(K_SIZE):
            off = (t - (K_SIZE - 1) // 2) * int(d)
            tap_idx[off].append((j, t))
    offsets = tuple(sorted(tap_idx))
    coefs = jnp.stack(
        [2.0 * sum(w[j, t].astype(jnp.float32) for (j, t) in tap_idx[off])
         for off in offsets])
    return offsets, coefs


def _build_channel_operator(offsets, coefs, C):
    """Dense (C, C) operator A with logits_row = pooled_row @ A."""
    A = jnp.zeros((C, C), jnp.float32)
    for i, off in enumerate(offsets):
        A = A + coefs[i] * jnp.eye(C, dtype=jnp.float32, k=-off)
    return A


def _banded_logits_host(pooled, offsets, coefs):
    """Plain-JAX banded conv on a (B, C) pooled vector (two-pass path)."""
    C = pooled.shape[-1]
    logits = jnp.zeros_like(pooled)
    for i, off in enumerate(offsets):
        if off == 0:
            sh = pooled
        elif off > 0:
            sh = jnp.pad(pooled[:, off:], ((0, 0), (0, off)))
        else:
            sh = jnp.pad(pooled[:, :C + off], ((0, 0), (-off, 0)))
        logits = logits + coefs[i] * sh
    return logits


def _pick_batch_tile(B, per_image_bytes, per_block_budget):
    """Largest batch tile fitting the budget; prefer >= MIN_GRID_STEPS grid
    steps but never shrink a block below ~MIN_BLOCK_BYTES chasing step count."""
    bt_fit = max(1, min(B, per_block_budget // per_image_bytes))
    bt_steps = max(1, pl.cdiv(B, MIN_GRID_STEPS))
    bt_floor = max(1, MIN_BLOCK_BYTES // per_image_bytes)
    return int(min(bt_fit, max(bt_steps, bt_floor)))


# ---------------------------------------------------------------------------
# kernels
# ---------------------------------------------------------------------------
def _dense_kernel(a_ref, x_ref, o_ref):
    # a_ref: (C, C) f32 folded operator; x_ref/o_ref: (Bt, C, HW), lane axis = HW.
    mx = jnp.max(x_ref[...], axis=-1).astype(jnp.float32)            # (Bt, C)
    logits = jnp.dot(mx, a_ref[...], preferred_element_type=jnp.float32)
    scale = jax.nn.sigmoid(logits).astype(o_ref.dtype)
    o_ref[...] = x_ref[...] * scale[:, :, None]


def _make_banded_kernel(offsets):
    """Large-C path: ~3*n_branch shift+axpy taps on the (Bt, C) pooled vector
    instead of a dense (C, C) MXU matmul (no operator in VMEM at all)."""
    def kernel(coef_ref, x_ref, o_ref):                              # coef_ref: SMEM (n_taps,)
        mx = jnp.max(x_ref[...], axis=-1).astype(jnp.float32)        # (Bt, C)
        bt, C = mx.shape
        logits = jnp.zeros_like(mx)
        for i, off in enumerate(offsets):                            # static tap offsets
            c = coef_ref[i]
            if off == 0:
                sh = mx
            elif off > 0:
                sh = jnp.concatenate(
                    [mx[:, off:], jnp.zeros((bt, off), mx.dtype)], axis=-1)
            else:
                sh = jnp.concatenate(
                    [jnp.zeros((bt, -off), mx.dtype), mx[:, :C + off]], axis=-1)
            logits = logits + c * sh
        scale = jax.nn.sigmoid(logits).astype(o_ref.dtype)
        o_ref[...] = x_ref[...] * scale[:, :, None]
    return kernel


# ---------------------------------------------------------------------------
# drivers
# ---------------------------------------------------------------------------
def _fused_forward(x_flat, op, op_spec, kernel, bt, vmem_limit, donate_x):
    B, C, HW = x_flat.shape
    grid = (pl.cdiv(B, bt),)                      # partial last batch block is masked
    alias = {"input_output_aliases": {1: 0}} if donate_x else {}
    return pl.pallas_call(
        kernel,
        out_shape=jax.ShapeDtypeStruct((B, C, HW), x_flat.dtype),
        grid=grid,
        in_specs=[op_spec,
                  pl.BlockSpec((bt, C, HW), lambda b: (b, 0, 0))],
        out_specs=pl.BlockSpec((bt, C, HW), lambda b: (b, 0, 0)),
        compiler_params=pltpu.CompilerParams(
            dimension_semantics=("parallel",),
            vmem_limit_bytes=vmem_limit),
        **alias,
    )(op, x_flat)


def _two_pass_forward(x_flat, offsets, coefs, bt, hw_tile, vmem_limit, donate_x):
    """Fallback when a whole (C, HW) image does not fit in VMEM: HW-tiled
    blocked max, tiny host-side conv+sigmoid, HW-tiled rescale (~1.5x HBM)."""
    B, C, HW = x_flat.shape
    grid = (pl.cdiv(B, bt), pl.cdiv(HW, hw_tile))

    def max_kernel(x_ref, p_ref):
        h = pl.program_id(1)
        xv = x_ref[...].astype(jnp.float32)
        lane = jax.lax.broadcasted_iota(jnp.int32, xv.shape, 2)
        xv = jnp.where(h * hw_tile + lane < HW, xv, -jnp.inf)        # mask ragged tail
        tile_max = jnp.max(xv, axis=-1)[:, :, None]                  # (Bt, C, 1)

        @pl.when(h == 0)
        def _():
            p_ref[...] = tile_max

        @pl.when(h > 0)
        def _():
            p_ref[...] = jnp.maximum(p_ref[...], tile_max)

    pooled = pl.pallas_call(
        max_kernel,
        out_shape=jax.ShapeDtypeStruct((B, C, 1), jnp.float32),
        grid=grid,
        in_specs=[pl.BlockSpec((bt, C, hw_tile), lambda b, h: (b, 0, h))],
        out_specs=pl.BlockSpec((bt, C, 1), lambda b, h: (b, 0, 0)),   # resident over hw axis
        compiler_params=pltpu.CompilerParams(
            dimension_semantics=("parallel", "arbitrary"),
            vmem_limit_bytes=vmem_limit),
    )(x_flat)

    # Tiny (B, C) channel conv + sigmoid between the two bulk passes.
    logits = _banded_logits_host(pooled[:, :, 0], offsets, coefs)
    scale = jax.nn.sigmoid(logits)[:, :, None].astype(x_flat.dtype)   # (B, C, 1)

    def rescale_kernel(s_ref, x_ref, o_ref):
        o_ref[...] = x_ref[...] * s_ref[...]

    alias = {"input_output_aliases": {1: 0}} if donate_x else {}
    return pl.pallas_call(
        rescale_kernel,
        out_shape=jax.ShapeDtypeStruct((B, C, HW), x_flat.dtype),
        grid=grid,
        in_specs=[pl.BlockSpec((bt, C, 1), lambda b, h: (b, 0, 0)),
                  pl.BlockSpec((bt, C, hw_tile), lambda b, h: (b, 0, h))],
        out_specs=pl.BlockSpec((bt, C, hw_tile), lambda b, h: (b, 0, h)),
        compiler_params=pltpu.CompilerParams(
            dimension_semantics=("parallel", "parallel"),
            vmem_limit_bytes=vmem_limit),
        **alias,
    )(scale, x_flat)


def eca_forward(x, w, dilations, *, donate_x=False,
                force_banded=None, force_two_pass=False, hw_tile=None):
    B, C, H, W = x.shape
    HW = H * W
    itemsize = jnp.dtype(x.dtype).itemsize
    x_flat = x.reshape(B, C, HW)                 # free reshape; lane axis = HW
    # TODO(synk): if HW % 128 != 0 the tail stores are masked; padding HW to a
    # lane multiple would cost an extra full HBM pass, so it is not done here.

    _, vmem_limit = _vmem_limits()
    offsets, coefs = _build_taps(w, dilations)
    use_banded = (C > DENSE_C_MAX) if force_banded is None else bool(force_banded)

    if use_banded:
        op = coefs                                                     # (n_taps,) f32
        op_spec = pl.BlockSpec((int(coefs.shape[0]),), lambda b: (0,),
                               memory_space=pltpu.MemorySpace.SMEM)
        op_live = 4096                                                 # SMEM, negligible
        kernel = _make_banded_kernel(offsets)
    else:
        op = _build_channel_operator(offsets, coefs, C)                # (C, C) f32, <= 1 MiB
        op_spec = pl.BlockSpec((C, C), lambda b: (0, 0))
        op_live = 2 * op.size * op.dtype.itemsize                      # double-buffered
        kernel = _dense_kernel

    # 2 in + 2 out double buffers + ~2 block-sized temporaries + operator + headroom.
    per_block_budget = max(0, (vmem_limit - op_live - (2 << 20)) // 6)
    per_image_bytes = C * HW * itemsize

    if force_two_pass or per_image_bytes > per_block_budget:
        if hw_tile is None:
            hw_tile = max(LANE, (per_block_budget // (C * itemsize)) // LANE * LANE)
        hw_tile = int(min(hw_tile, pl.cdiv(HW, LANE) * LANE))
        bt = max(1, min(B, per_block_budget // (C * hw_tile * itemsize)))
        out = _two_pass_forward(x_flat, offsets, coefs, bt, hw_tile,
                                vmem_limit, donate_x)
    else:
        bt = _pick_batch_tile(B, per_image_bytes, per_block_budget)
        out = _fused_forward(x_flat, op, op_spec, kernel, bt, vmem_limit, donate_x)
    return out.reshape(B, C, H, W)


# ---------------------------------------------------------------------------
# pure-JAX reference (mirrors the PyTorch forward with cat=False, res=False)
# ---------------------------------------------------------------------------
def reference(x, w, dilations):
    B, C, H, W = x.shape
    max_y = jnp.max(x, axis=(2, 3)).astype(jnp.float32)               # (B, C)

    def conv1d(y, wk, d):                                             # Conv1d(1,1,3,pad=d,dil=d)
        yp = jnp.pad(y, ((0, 0), (d, d)))
        return (wk[0] * yp[:, 0:C] + wk[1] * yp[:, d:d + C]
                + wk[2] * yp[:, 2 * d:2 * d + C])

    s = jnp.zeros((B, C), jnp.float32)
    for j, d in enumerate(dilations):
        s = s + conv1d(max_y, w[j], d)
    out = s + s                                                       # avg branch + max branch
    scale = jax.nn.sigmoid(out)[:, :, None, None]
    return x * scale.astype(x.dtype)


if __name__ == "__main__":
    key = jax.random.PRNGKey(0)
    B, C, H, W = 2, 16, 16, 16
    strid = 1
    rates = [2, 3, 4]
    # First conv: dilation 1, padding (k-1)//2; then dilation = strid*r, padding = r.
    dilations = (1,) + tuple(strid * r for r in rates)

    k_x, k_w = jax.random.split(key)
    x = jax.random.normal(k_x, (B, C, H, W), jnp.float32)
    bound = 1.0 / (1 * K_SIZE) ** 0.5
    w = jax.random.uniform(k_w, (len(dilations), K_SIZE), jnp.float32,
                           minval=-bound, maxval=bound)

    ref = reference(x, w, dilations)

    # 1) fused single pass, dense folded operator (default for small C)
    out = jax.block_until_ready(eca_forward(x, w, dilations))
    assert jnp.allclose(out, ref, atol=1e-5, rtol=1e-5), \
        float(jnp.max(jnp.abs(out - ref)))

    # 2) fused single pass, banded taps (the large-C path, forced here)
    out_b = jax.block_until_ready(eca_forward(x, w, dilations, force_banded=True))
    assert jnp.allclose(out_b, ref, atol=1e-5, rtol=1e-5), \
        float(jnp.max(jnp.abs(out_b - ref)))

    # 3) two-pass HW-tiled fallback (used when a (C, HW) image exceeds VMEM)
    out_t = jax.block_until_ready(
        eca_forward(x, w, dilations, force_two_pass=True, hw_tile=128))
    assert jnp.allclose(out_t, ref, atol=1e-5, rtol=1e-5), \
        float(jnp.max(jnp.abs(out_t - ref)))

    print("KERNEL_OK")
</pallas_src>

<mosaic_0001>
module attributes {stable_mosaic.version = 11 : i64} {
  func.func @_dense_kernel(%arg0: i32, %arg1: memref<16x16xf32, #tpu.memory_space<vmem>>, %arg2: memref<2x16x256xf32, #tpu.memory_space<vmem>>, %arg3: memref<2x16x256xf32, #tpu.memory_space<vmem>>) attributes {dimension_semantics = [#tpu.dimension_semantics<parallel>], iteration_bounds = array<i64: 1>, scalar_prefetch = 0 : i64, scratch_operands = 0 : i64, tpu.core_type = #tpu.core_type<tc>, window_params = [{pipeline_mode = #tpu.pipeline_mode<synchronous>, transform_indices = @transform_0, window_bounds = array<i64: 16, 16>}, {transform_indices = @transform_1, window_bounds = array<i64: 2, 16, 256>}, {transform_indices = @transform_2, window_bounds = array<i64: 2, 16, 256>}]} {
    %c0 = arith.constant 0 : index
    %c0_0 = arith.constant 0 : index
    %c0_1 = arith.constant 0 : index
    %0 = vector.load %arg2[%c0, %c0_0, %c0_1] : memref<2x16x256xf32, #tpu.memory_space<vmem>>, vector<2x16x256xf32>
    %cst = arith.constant dense<0xFF800000> : vector<2x16xf32>
    %1 = vector.multi_reduction <maximumf>, %0, %cst [2] : vector<2x16x256xf32> to vector<2x16xf32>
    %c0_2 = arith.constant 0 : index
    %c0_3 = arith.constant 0 : index
    %2 = vector.load %arg1[%c0_2, %c0_3] : memref<16x16xf32, #tpu.memory_space<vmem>>, vector<16x16xf32>
    %cst_4 = arith.constant dense<0.000000e+00> : vector<2x16xf32>
    %3 = tpu.matmul %1, %2, %cst_4 {dimension_numbers = #tpu.dot_dimension_numbers<[1], [0], [0], [1], [0, 0, 1, 1], [], []>} : vector<2x16xf32>, vector<16x16xf32>, vector<2x16xf32> -> vector<2x16xf32>
    %4 = arith.negf %3 : vector<2x16xf32>
    %5 = math.exp %4 : vector<2x16xf32>
    %cst_5 = arith.constant 1.000000e+00 : f32
    %6 = vector.broadcast %cst_5 : f32 to vector<2x16xf32>
    %7 = arith.addf %6, %5 : vector<2x16xf32>
    %8 = arith.divf %6, %7 : vector<2x16xf32>
    %c0_6 = arith.constant 0 : index
    %c0_7 = arith.constant 0 : index
    %c0_8 = arith.constant 0 : index
    %9 = vector.load %arg2[%c0_6, %c0_7, %c0_8] : memref<2x16x256xf32, #tpu.memory_space<vmem>>, vector<2x16x256xf32>
    %10 = vector.shape_cast %8 : vector<2x16xf32> to vector<2x16x1xf32>
    %11 = vector.broadcast %10 : vector<2x16x1xf32> to vector<2x16x256xf32>
    %12 = arith.mulf %9, %11 : vector<2x16x256xf32>
    %c0_9 = arith.constant 0 : index
    %c0_10 = arith.constant 0 : index
    %c0_11 = arith.constant 0 : index
    %13 = vector.load %arg3[%c0_9, %c0_10, %c0_11] : memref<2x16x256xf32, #tpu.memory_space<vmem>>, vector<2x16x256xf32>
    tpu.vector_store %arg3[%c0_9, %c0_10, %c0_11], %12 {strides = array<i32>} : memref<2x16x256xf32, #tpu.memory_space<vmem>>, vector<2x16x256xf32>,
    return
  }
  func.func @transform_0(%arg0: i32) -> (i32, i32) {
    %c0_i32 = arith.constant 0 : i32
    %c0_i32_0 = arith.constant 0 : i32
    %c0_i32_1 = arith.constant 0 : i32
    return %c0_i32, %c0_i32_0 : i32, i32
  }
  func.func @transform_1(%arg0: i32) -> (i32, i32, i32) {
    %c0_i32 = arith.constant 0 : i32
    %c0_i32_0 = arith.constant 0 : i32
    %c0_i32_1 = arith.constant 0 : i32
    return %arg0, %c0_i32, %c0_i32_0 : i32, i32, i32
  }
  func.func @transform_2(%arg0: i32) -> (i32, i32, i32) {
    %c0_i32 = arith.constant 0 : i32
    %c0_i32_0 = arith.constant 0 : i32
    %c0_i32_1 = arith.constant 0 : i32
    return %arg0, %c0_i32, %c0_i32_0 : i32, i32, i32
  }
}

</mosaic_0001>

<llo_original>
// kernel: tpu_custom_call.1
$region0: #{tpu_custom_call.1}
  #allocation0 [shape = 'u32[]', space=smem, size = 0x4, offset = 0x4, fixed_abs, tag = 'smem constant byte address 0x4 - core index']
  #allocation1 [shape = 'u32[144,128]{1,0:T(1,128)}', space=vmem, size = 0x12000, scoped, tag = 'internal scratch']
  %s0 = inlined_call_operand.hbm [shape: f32[16,16], index: 0, kind: input, shape index: {}]
  %s1 = inlined_call_operand.hbm [shape: f32[2,16,256], index: 1, kind: input, shape index: {}]
  %s2 = inlined_call_operand.hbm [shape: f32[2,16,256], index: 2, kind: output, shape index: {}]
  %s3 = sld [smem:[#allocation0]]
  $region26: #{tpu_custom_call.1} parent=0
    _
  %s5 = ssub.s32 1, %s3
  %s6 = scalar_select 0, %s5, %s3
  $region1: #{tpu_custom_call.1} parent=0
    #allocation2 [shape = 'u8[8192]{0}', space=vmem, size = 0x2000, scoped, tag = 'input window, operand 0, single buffered']
    #allocation3 [shape = 's32[1]{0}', space=sflag, size = 0x4, scoped, tag = 'scoped memory for tpu_custom_call.1']
    #allocation4 [shape = 's32[1]{0}', space=sflag, size = 0x4, scoped, tag = 'scoped memory for tpu_custom_call.1']
    #allocation5 [shape = 'u8[32768]{0}', space=vmem, size = 0x8000, scoped, tag = 'input window, operand 1, single buffered']
    #allocation6 [shape = 's32[1]{0}', space=sflag, size = 0x4, scoped, tag = 'scoped memory for tpu_custom_call.1']
    #allocation7 [shape = 'u8[32768]{0}', space=vmem, size = 0x8000, scoped, tag = 'output window, operand 0, single buffered']
    %7 = vsyncpa [#allocation3], 0
    %8 = vsyncpa [#allocation6], 0
    %9 = vsyncpa [#allocation4], 0
    // Predicated region
    $region2: #{tpu_custom_call.1} parent=1 // pred_check
      _
    $region3: #{tpu_custom_call.1} parent=1 // pred_check_branch
      %11 = sbr.rel (0) target = $region5
    $region4: #{tpu_custom_call.1} parent=1 // pred_region
      %s13 = ssub.s32 256, 256
      %14 = vsyncadd [#allocation3], %s13
      %s15 = sshll.u32 [#allocation2], 4
      %s16 = int_to_ptr.vmem [resolvable:$true] %s15
      %21 = dma.hbm_to_vmem [thread:$0]  %s0, 256, %s16, [#allocation3], 128, 128, 8
    $region5: #{tpu_custom_call.1} parent=1 // pred_fallthru
      _
    // Predicated region
    $region6: #{tpu_custom_call.1} parent=1 // pred_check
      _
    $region7: #{tpu_custom_call.1} parent=1 // pred_check_branch
      %23 = sbr.rel (0) target = $region9
    $region8: #{tpu_custom_call.1} parent=1 // pred_region
      %s25 = ssub.s32 1024, 1024
      %26 = vsyncadd [#allocation6], %s25
      %s27 = sshll.u32 [#allocation5], 4
      %s28 = int_to_ptr.vmem [resolvable:$true] %s27
      %33 = dma.hbm_to_vmem [thread:$0]  %s1, 1024, %s28, [#allocation6], 256, 256, 16
    $region9: #{tpu_custom_call.1} parent=1 // pred_fallthru
      _
    // Predicated region
    $region10: #{tpu_custom_call.1} parent=1 // pred_check
      _
    $region11: #{tpu_custom_call.1} parent=1 // pred_check_branch
      %35 = sbr.rel (0) target = $region13
    $region12: #{tpu_custom_call.1} parent=1 // pred_region
      %36 = dma.done [#allocation3], 256
    $region13: #{tpu_custom_call.1} parent=1 // pred_fallthru
      _
    // Predicated region
    $region14: #{tpu_custom_call.1} parent=1 // pred_check
      _
    $region15: #{tpu_custom_call.1} parent=1 // pred_check_branch
      %38 = sbr.rel (0) target = $region17
    $region16: #{tpu_custom_call.1} parent=1 // pred_region
      %39 = dma.done [#allocation6], 1024
    $region17: #{tpu_custom_call.1} parent=1 // pred_fallthru
      _
    %v40 = vld [vmem:[#allocation5] sm:$0xff]
    %v41 = vld [vmem:[#allocation5 + $0x8] sm:$0xff]
    %v42 = vld [vmem:[#allocation5 + $0x10] sm:$0xff]
    %v43 = vld [vmem:[#allocation5 + $0x18] sm:$0xff]
    %v44 = vld [vmem:[#allocation5 + $0x20] sm:$0xff]
    %v45 = vld [vmem:[#allocation5 + $0x28] sm:$0xff]
    %v46 = vld [vmem:[#allocation5 + $0x30] sm:$0xff]
    %v47 = vld [vmem:[#allocation5 + $0x38] sm:$0xff]
    %v48 = vmax.f32 %v40, %v41
    %49 = vmax.xlane.f32.xlu0 %v48
    %v50 = vpop.xlane.xlu0 %49
    %v51 = vmax.f32 %v42, %v43
    %52 = vmax.xlane.f32.xlu0 %v51
    %v53 = vpop.xlane.xlu0 %52
    %v54 = vmax.f32 %v44, %v45
    %55 = vmax.xlane.f32.xlu0 %v54
    %v56 = vpop.xlane.xlu0 %55
    %v57 = vmax.f32 %v46, %v47
    %58 = vmax.xlane.f32.xlu0 %v57
    %v59 = vpop.xlane.xlu0 %58
    %v60 = vld [vmem:[#allocation2] sm:$0xff]
    %v61 = vld [vmem:[#allocation2 + $0x8] sm:$0xff]
    %v66 = vlaneseq
    %v67 = vand.u32 %v66, 127
    %v68 = vlaneseq
    %v69 = vshrl.u32 %v68, 7
    %v70 = vsub.s32 %v67, %v69
    %v71 = vrot.slane %v50, %v70
    %v72 = vadd.s32 %v67, 4294967288
    %v73 = vlaneseq
    %v74 = vshrl.u32 %v73, 7
    %v75 = vsub.s32 %v72, %v74
    %v76 = vrot.slane %v53, %v75
    %vm77 = vcmask 130112
    %v78 = vsel %vm77, %v76, %v71
    %v79 = vlaneseq
    %v80 = vshrl.u32 %v79, 7
    %v81 = vsub.s32 %v67, %v80
    %v82 = vrot.slane %v56, %v81
    %v83 = vlaneseq
    %v84 = vshrl.u32 %v83, 7
    %v85 = vsub.s32 %v72, %v84
    %v86 = vrot.slane %v59, %v85
    %v87 = vsel %vm77, %v86, %v82
    %vm88 = vcmask 1041409
    %v89 = vsel %vm88, %v87, %v78
    %vm90 = vcmask 130048
    %v91 = vsel %vm90, %v89, 0
    %93 = vmatprep.subr.mxu0 0.0
    %94 = vmatpush1.msra.mxu0 %v60
    %95 = vmatprep.subr.mxu0 0.0
    %96 = vmatpush1.msra.mxu0 %v61
    %97 = vmatprep.subr.mxu0 0.0
    %98 = vmatpush1.msra.mxu0 0.0
    %99 = vmatprep.subr.mxu0 0.0
    %100 = vmatpush1.msra.mxu0 0.0
    %101 = vmatprep.subr.mxu0 0.0
    %102 = vmatpush1.msra.mxu0 0.0
    %103 = vmatprep.subr.mxu0 0.0
    %104 = vmatpush1.msra.mxu0 0.0
    %105 = vmatprep.subr.mxu0 0.0
    %106 = vmatpush1.msra.mxu0 0.0
    %107 = vmatprep.subr.mxu0 0.0
    %108 = vmatpush1.msra.mxu0 0.0
    %109 = vmatprep.subr.mxu0 0.0
    %110 = vmatpush1.msra.mxu0 0.0
    %111 = vmatprep.subr.mxu0 0.0
    %112 = vmatpush1.msra.mxu0 0.0
    %113 = vmatprep.subr.mxu0 0.0
    %114 = vmatpush1.msra.mxu0 0.0
    %115 = vmatprep.subr.mxu0 0.0
    %116 = vmatpush1.msra.mxu0 0.0
    %117 = vmatprep.subr.mxu0 0.0
    %118 = vmatpush1.msra.mxu0 0.0
    %119 = vmatprep.subr.mxu0 0.0
    %120 = vmatpush1.msra.mxu0 0.0
    %121 = vmatprep.subr.mxu0 0.0
    %122 = vmatpush1.msra.mxu0 0.0
    %123 = vmatprep.subr.mxu0 0.0
    %124 = vmatpush1.msra.mxu0 0.0
    %125 = vmatprep.subr.mxu0 0.0
    %126 = vmatpush1.msra.mxu0 0.0
    %127 = vmatprep.subr.mxu0 0.0
    %128 = vmatpush1.msra.mxu0 0.0
    %129 = vmatprep.subr.mxu0 0.0
    %130 = vmatpush1.msra.mxu0 0.0
    %131 = vmatprep.subr.mxu0 0.0
    %132 = vmatpush1.msra.mxu0 0.0
    %133 = vmatprep.subr.mxu0 0.0
    %134 = vmatpush1.msra.mxu0 0.0
    %135 = vmatprep.subr.mxu0 0.0
    %136 = vmatpush1.msra.mxu0 0.0
    %137 = vmatprep.subr.mxu0 0.0
    %138 = vmatpush1.msra.mxu0 0.0
    %139 = vmatprep.subr.mxu0 0.0
    %140 = vmatpush1.msra.mxu0 0.0
    %141 = vmatprep.subr.mxu0 0.0
    %142 = vmatpush1.msra.mxu0 0.0
    %143 = vmatprep.subr.mxu0 0.0
    %144 = vmatpush1.msra.mxu0 0.0
    %145 = vmatprep.subr.mxu0 0.0
    %146 = vmatpush1.msra.mxu0 0.0
    %147 = vmatprep.subr.mxu0 0.0
    %148 = vmatpush1.msra.mxu0 0.0
    %149 = vmatprep.subr.mxu0 0.0
    %150 = vmatpush1.msra.mxu0 0.0
    %151 = vmatprep.subr.mxu0 0.0
    %152 = vmatpush1.msra.mxu0 0.0
    %153 = vmatprep.subr.mxu0 0.0
    %154 = vmatpush1.msra.mxu0 0.0
    %155 = vmatprep.subr.mxu0 0.0
    %156 = vmatpush1.msra.mxu0 0.0
    %157 = vmatprep.mubr.f32.mxu0 0.0
    %158 = vmatmul.mubr.f32.gmra.mrb[0].mxu0 %v91
    %v159 = vpop.f32.mrb[0].mxu0
    %v160 = vadd.f32 0.0, %v159
    %v161 = vpop.f32.mrb[0].mxu0
    %162 = vdwg.mxu0
    %v163 = vxor.u32 %v160, 2147483648
    %v164 = vmul.f32 %v163, 1.442695
    %v165 = vpow.pop %v164
    %v166 = vadd.f32 %v165, 1.0
    %v167 = vrcp.pop %v166
    %v168 = vmul.f32 1.0, %v167
    %v169 = vlaneseq
    %v170 = vshrl.u32 %v169, 7
    %v171 = vsub.s32 0, %v170
    %v172 = vrot.slane %v168, %v171
    %174 = vbcast.lane.b32.xlu0 %v172, 256
    %v175 = vpop.permute.xlu0 %174
    %s177 = sor.u32 256, 8
    %178 = vbcast.lane.b32.xlu0 %v172, %s177
    %v179 = vpop.permute.xlu0 %178
    %v180 = vlaneseq
    %v181 = vshrl.u32 %v180, 7
    %v182 = vsub.s32 1, %v181
    %v183 = vrot.slane %v168, %v182
    %185 = vbcast.lane.b32.xlu0 %v183, 256
    %v186 = vpop.permute.xlu0 %185
    %s188 = sor.u32 256, 8
    %189 = vbcast.lane.b32.xlu0 %v183, %s188
    %v190 = vpop.permute.xlu0 %189
    %v191 = vmul.f32 %v40, %v175
    %v192 = vmul.f32 %v41, %v175
    %v193 = vmul.f32 %v42, %v179
    %v194 = vmul.f32 %v43, %v179
    %v195 = vmul.f32 %v44, %v186
    %v196 = vmul.f32 %v45, %v186
    %v197 = vmul.f32 %v46, %v190
    %v198 = vmul.f32 %v47, %v190
    %199 = vst [vmem:[#allocation7] sm:$0xff] %v191
    %200 = vst [vmem:[#allocation7 + $0x8] sm:$0xff] %v192
    %201 = vst [vmem:[#allocation7 + $0x10] sm:$0xff] %v193
    %202 = vst [vmem:[#allocation7 + $0x18] sm:$0xff] %v194
    %203 = vst [vmem:[#allocation7 + $0x20] sm:$0xff] %v195
    %204 = vst [vmem:[#allocation7 + $0x28] sm:$0xff] %v196
    %205 = vst [vmem:[#allocation7 + $0x30] sm:$0xff] %v197
    %206 = vst [vmem:[#allocation7 + $0x38] sm:$0xff] %v198
    // Predicated region
    $region18: #{tpu_custom_call.1} parent=1 // pred_check
      _
    $region19: #{tpu_custom_call.1} parent=1 // pred_check_branch
      %208 = sbr.rel (0) target = $region21
    $region20: #{tpu_custom_call.1} parent=1 // pred_region
      %s210 = ssub.s32 1024, 1024
      %211 = vsyncadd [#allocation4], %s210
      %s212 = sshll.u32 [#allocation7], 4
      %s213 = int_to_ptr.vmem [resolvable:$true] %s212
      %218 = dma.vmem_to_hbm [thread:$0]  %s213, 1024, %s2, [#allocation4], 256, 256, 16
    $region21: #{tpu_custom_call.1} parent=1 // pred_fallthru
      _
    // Predicated region
    $region22: #{tpu_custom_call.1} parent=1 // pred_check
      _
    $region23: #{tpu_custom_call.1} parent=1 // pred_check_branch
      %220 = sbr.rel (0) target = $region25
    $region24: #{tpu_custom_call.1} parent=1 // pred_region
      %221 = dma.done [#allocation4], 1024
    $region25: #{tpu_custom_call.1} parent=1 // pred_fallthru
      _
    %222 = vsyncpa [#allocation3], 1
    %223 = vsyncpa [#allocation6], 1
    %224 = vsyncpa [#allocation4], 1

</llo_original>
